<compile_context>
chip_gen: v5e
topology: v5e:2x2
jax: 0.10.0
libtpu: 0.0.40
codegen_flags: <defaults>
</compile_context>

<pallas_src>
import jax
import jax.numpy as jnp
import numpy as np
from jax.experimental import pallas as pl
from jax.experimental.pallas import tpu as pltpu

# ---------------- configuration ----------------
BATCH = 2
IN_DIM = 4            # bbox has 4 coordinates
SIZE = 32             # embedding dimension ("size" in the module)
SCALING = 112.0       # module default


# ---------------- Pallas kernel ----------------
def bbox_encoding_kernel(bbox_ref, wb_ref, out_ref):
    # bbox_ref: (B, 4)
    # wb_ref:   (5, SIZE)  rows 0..3 = W / scaling, row 4 = bias
    # out_ref:  (B, SIZE)
    x = bbox_ref[...]                      # (B, 4)   one vector load
    w = wb_ref[...]                        # (5, SIZE) one vector load
    # Unrolled K=4 VPU multiply-accumulate (no MXU push for a 512-FLOP matmul),
    # bias added as the final broadcast term.
    out = (x[:, 0:1] * w[0:1, :]
           + x[:, 1:2] * w[1:2, :]
           + x[:, 2:3] * w[2:3, :]
           + x[:, 3:4] * w[3:4, :]
           + w[4:5, :])
    out_ref[...] = out.astype(out_ref.dtype)


# ---------------- wrapper ----------------
def bbox_learned_encoding_forward(bbox, wb_packed):
    """bbox: (B, 4) float32, wb_packed: (5, SIZE) float32 -> (B, SIZE) float32."""
    b = bbox.shape[0]
    return pl.pallas_call(
        bbox_encoding_kernel,
        out_shape=jax.ShapeDtypeStruct((b, SIZE), jnp.float32),
        grid=(1,),  # whole batch in a single step — fixed cost dominates, fewest steps wins
        in_specs=[
            pl.BlockSpec((b, IN_DIM), lambda i: (0, 0)),
            pl.BlockSpec((IN_DIM + 1, SIZE), lambda i: (0, 0)),
        ],
        out_specs=pl.BlockSpec((b, SIZE), lambda i: (0, 0)),
        compiler_params=pltpu.CompilerParams(
            dimension_semantics=("arbitrary",)),
    )(bbox, wb_packed)


# ---------------- pure-JAX reference (for correctness check) ----------------
def reference_forward(bbox, params):
    # Matches the PyTorch module exactly: Linear(4, size)(bbox / scaling)
    return (bbox / SCALING) @ params["w"] + params["b"]


# ---------------- deterministic parameter init + one-time packing ----------------
def init_params(key):
    k_w, k_b = jax.random.split(key)
    # torch.nn.Linear-style uniform(-1/sqrt(fan_in), 1/sqrt(fan_in)), fan_in=4.
    bound = 1.0 / np.sqrt(IN_DIM)
    return {
        # stored as (in, out) = transpose of torch's (out, in) weight
        "w": jax.random.uniform(k_w, (IN_DIM, SIZE), jnp.float32, -bound, bound),
        "b": jax.random.uniform(k_b, (1, SIZE), jnp.float32, -bound, bound),
    }


def pack_params(params):
    """One-time constant fold: rows 0..3 = W/scaling, row 4 = bias. Done at load
    time, NOT per call — no runtime XLA op is created by this."""
    w_scaled = params["w"] / SCALING           # (4, SIZE)
    return jnp.concatenate([w_scaled, params["b"]], axis=0)  # (5, SIZE)


if __name__ == "__main__":
    key = jax.random.PRNGKey(0)
    k_x, k_p = jax.random.split(key)
    # bbox coordinates roughly in pixel range [0, 112)
    bbox = jax.random.uniform(k_x, (BATCH, IN_DIM), jnp.float32, 0.0, SCALING)
    params = init_params(k_p)
    wb_packed = jax.block_until_ready(pack_params(params))  # one-time, outside the call path

    out = jax.block_until_ready(bbox_learned_encoding_forward(bbox, wb_packed))
    ref = jax.block_until_ready(reference_forward(bbox, params))

    np.testing.assert_allclose(np.asarray(out), np.asarray(ref),
                               rtol=1e-5, atol=1e-5)
    assert out.shape == (BATCH, SIZE) and out.dtype == jnp.float32
    print("KERNEL_OK")
</pallas_src>

<mosaic_0001>
module attributes {stable_mosaic.version = 11 : i64} {
  func.func @bbox_encoding_kernel(%arg0: i32, %arg1: memref<2x4xf32, #tpu.memory_space<vmem>>, %arg2: memref<5x32xf32, #tpu.memory_space<vmem>>, %arg3: memref<2x32xf32, #tpu.memory_space<vmem>>) attributes {dimension_semantics = [#tpu.dimension_semantics<arbitrary>], iteration_bounds = array<i64: 1>, scalar_prefetch = 0 : i64, scratch_operands = 0 : i64, tpu.core_type = #tpu.core_type<tc>, window_params = [{pipeline_mode = #tpu.pipeline_mode<synchronous>, transform_indices = @transform_0, window_bounds = array<i64: 2, 4>}, {pipeline_mode = #tpu.pipeline_mode<synchronous>, transform_indices = @transform_1, window_bounds = array<i64: 5, 32>}, {pipeline_mode = #tpu.pipeline_mode<synchronous>, transform_indices = @transform_2, window_bounds = array<i64: 2, 32>}]} {
    %c0 = arith.constant 0 : index
    %c0_0 = arith.constant 0 : index
    %0 = vector.load %arg1[%c0, %c0_0] : memref<2x4xf32, #tpu.memory_space<vmem>>, vector<2x4xf32>
    %c0_1 = arith.constant 0 : index
    %c0_2 = arith.constant 0 : index
    %1 = vector.load %arg2[%c0_1, %c0_2] : memref<5x32xf32, #tpu.memory_space<vmem>>, vector<5x32xf32>
    %2 = vector.extract_strided_slice %0 {offsets = [0, 0], sizes = [2, 1], strides = [1, 1]} : vector<2x4xf32> to vector<2x1xf32>
    %3 = vector.extract_strided_slice %1 {offsets = [0, 0], sizes = [1, 32], strides = [1, 1]} : vector<5x32xf32> to vector<1x32xf32>
    %4 = vector.broadcast %2 : vector<2x1xf32> to vector<2x32xf32>
    %5 = vector.broadcast %3 : vector<1x32xf32> to vector<2x32xf32>
    %6 = arith.mulf %4, %5 : vector<2x32xf32>
    %7 = vector.extract_strided_slice %0 {offsets = [0, 1], sizes = [2, 1], strides = [1, 1]} : vector<2x4xf32> to vector<2x1xf32>
    %8 = vector.extract_strided_slice %1 {offsets = [1, 0], sizes = [1, 32], strides = [1, 1]} : vector<5x32xf32> to vector<1x32xf32>
    %9 = vector.broadcast %7 : vector<2x1xf32> to vector<2x32xf32>
    %10 = vector.broadcast %8 : vector<1x32xf32> to vector<2x32xf32>
    %11 = arith.mulf %9, %10 : vector<2x32xf32>
    %12 = arith.addf %6, %11 : vector<2x32xf32>
    %13 = vector.extract_strided_slice %0 {offsets = [0, 2], sizes = [2, 1], strides = [1, 1]} : vector<2x4xf32> to vector<2x1xf32>
    %14 = vector.extract_strided_slice %1 {offsets = [2, 0], sizes = [1, 32], strides = [1, 1]} : vector<5x32xf32> to vector<1x32xf32>
    %15 = vector.broadcast %13 : vector<2x1xf32> to vector<2x32xf32>
    %16 = vector.broadcast %14 : vector<1x32xf32> to vector<2x32xf32>
    %17 = arith.mulf %15, %16 : vector<2x32xf32>
    %18 = arith.addf %12, %17 : vector<2x32xf32>
    %19 = vector.extract_strided_slice %0 {offsets = [0, 3], sizes = [2, 1], strides = [1, 1]} : vector<2x4xf32> to vector<2x1xf32>
    %20 = vector.extract_strided_slice %1 {offsets = [3, 0], sizes = [1, 32], strides = [1, 1]} : vector<5x32xf32> to vector<1x32xf32>
    %21 = vector.broadcast %19 : vector<2x1xf32> to vector<2x32xf32>
    %22 = vector.broadcast %20 : vector<1x32xf32> to vector<2x32xf32>
    %23 = arith.mulf %21, %22 : vector<2x32xf32>
    %24 = arith.addf %18, %23 : vector<2x32xf32>
    %25 = vector.extract_strided_slice %1 {offsets = [4, 0], sizes = [1, 32], strides = [1, 1]} : vector<5x32xf32> to vector<1x32xf32>
    %26 = vector.broadcast %25 : vector<1x32xf32> to vector<2x32xf32>
    %27 = arith.addf %24, %26 : vector<2x32xf32>
    %c0_3 = arith.constant 0 : index
    %c0_4 = arith.constant 0 : index
    %28 = vector.load %arg3[%c0_3, %c0_4] : memref<2x32xf32, #tpu.memory_space<vmem>>, vector<2x32xf32>
    tpu.vector_store %arg3[%c0_3, %c0_4], %27 {strides = array<i32>} : memref<2x32xf32, #tpu.memory_space<vmem>>, vector<2x32xf32>,
    return
  }
  func.func @transform_0(%arg0: i32) -> (i32, i32) {
    %c0_i32 = arith.constant 0 : i32
    %c0_i32_0 = arith.constant 0 : i32
    %c0_i32_1 = arith.constant 0 : i32
    return %c0_i32, %c0_i32_0 : i32, i32
  }
  func.func @transform_1(%arg0: i32) -> (i32, i32) {
    %c0_i32 = arith.constant 0 : i32
    %c0_i32_0 = arith.constant 0 : i32
    %c0_i32_1 = arith.constant 0 : i32
    return %c0_i32, %c0_i32_0 : i32, i32
  }
  func.func @transform_2(%arg0: i32) -> (i32, i32) {
    %c0_i32 = arith.constant 0 : i32
    %c0_i32_0 = arith.constant 0 : i32
    %c0_i32_1 = arith.constant 0 : i32
    return %c0_i32, %c0_i32_0 : i32, i32
  }
}

</mosaic_0001>

<llo_original>
// kernel: tpu_custom_call.1
$region0: #{tpu_custom_call.1}
  #allocation0 [shape = 'u32[]', space=smem, size = 0x4, offset = 0x4, fixed_abs, tag = 'smem constant byte address 0x4 - core index']
  #allocation1 [shape = 'u32[72,128]{1,0:T(1,128)}', space=vmem, size = 0x9000, scoped, tag = 'internal scratch']
  %s0 = inlined_call_operand.hbm [shape: f32[2,4], index: 0, kind: input, shape index: {}]
  %s1 = inlined_call_operand.hbm [shape: f32[5,32], index: 1, kind: input, shape index: {}]
  %s2 = inlined_call_operand.hbm [shape: f32[2,32], index: 2, kind: output, shape index: {}]
  %s3 = sld [smem:[#allocation0]]
  $region26: #{tpu_custom_call.1} parent=0
    _
  %s5 = ssub.s32 1, %s3
  %s6 = scalar_select 0, %s5, %s3
  $region1: #{tpu_custom_call.1} parent=0
    #allocation2 [shape = 'u8[1024]{0}', space=vmem, size = 0x400, scoped, tag = 'input window, operand 0, single buffered']
    #allocation3 [shape = 's32[1]{0}', space=sflag, size = 0x4, scoped, tag = 'scoped memory for tpu_custom_call.1']
    #allocation4 [shape = 's32[1]{0}', space=sflag, size = 0x4, scoped, tag = 'scoped memory for tpu_custom_call.1']
    #allocation5 [shape = 'u8[4096]{0}', space=vmem, size = 0x1000, scoped, tag = 'input window, operand 1, single buffered']
    #allocation6 [shape = 's32[1]{0}', space=sflag, size = 0x4, scoped, tag = 'scoped memory for tpu_custom_call.1']
    #allocation7 [shape = 'u8[1024]{0}', space=vmem, size = 0x400, scoped, tag = 'output window, operand 0, single buffered']
    %7 = vsyncpa [#allocation3], 0
    %8 = vsyncpa [#allocation6], 0
    %9 = vsyncpa [#allocation4], 0
    // Predicated region
    $region2: #{tpu_custom_call.1} parent=1 // pred_check
      _
    $region3: #{tpu_custom_call.1} parent=1 // pred_check_branch
      %11 = sbr.rel (0) target = $region5
    $region4: #{tpu_custom_call.1} parent=1 // pred_region
      %13 = vsyncadd [#allocation3], 0
      %s15 = sshll.u32 %s0, 4
      %s16 = int_to_ptr.hbm [resolvable:$true] %s15
      %s17 = sshll.u32 [#allocation2], 4
      %s18 = int_to_ptr.vmem [resolvable:$true] %s17
      %20 = dma.hbm_to_vmem [thread:$0]  %s16, 32, %s18, [#allocation3]
    $region5: #{tpu_custom_call.1} parent=1 // pred_fallthru
      _
    // Predicated region
    $region6: #{tpu_custom_call.1} parent=1 // pred_check
      _
    $region7: #{tpu_custom_call.1} parent=1 // pred_check_branch
      %22 = sbr.rel (0) target = $region9
    $region8: #{tpu_custom_call.1} parent=1 // pred_region
      %24 = vsyncadd [#allocation6], 0
      %s26 = sshll.u32 %s1, 4
      %s27 = int_to_ptr.hbm [resolvable:$true] %s26
      %s28 = sshll.u32 [#allocation5], 4
      %s29 = int_to_ptr.vmem [resolvable:$true] %s28
      %31 = dma.hbm_to_vmem [thread:$0]  %s27, 128, %s29, [#allocation6]
    $region9: #{tpu_custom_call.1} parent=1 // pred_fallthru
      _
    // Predicated region
    $region10: #{tpu_custom_call.1} parent=1 // pred_check
      _
    $region11: #{tpu_custom_call.1} parent=1 // pred_check_branch
      %33 = sbr.rel (0) target = $region13
    $region12: #{tpu_custom_call.1} parent=1 // pred_region
      %35 = dma.done [#allocation3], 32
    $region13: #{tpu_custom_call.1} parent=1 // pred_fallthru
      _
    // Predicated region
    $region14: #{tpu_custom_call.1} parent=1 // pred_check
      _
    $region15: #{tpu_custom_call.1} parent=1 // pred_check_branch
      %37 = sbr.rel (0) target = $region17
    $region16: #{tpu_custom_call.1} parent=1 // pred_region
      %39 = dma.done [#allocation6], 128
    $region17: #{tpu_custom_call.1} parent=1 // pred_fallthru
      _
    %v40 = vld [vmem:[#allocation2] sm:$0x3]
    %v41 = vld [vmem:[#allocation5] sm:$0x1f]
    %43 = vset.pattern.permute.xlu0 0
    %44 = vperm.xlu0 %43, %v40
    %v45 = vpop.permute.xlu0 %44
    %v47 = vperm.slane %v41, 0
    %v48 = vmul.f32 %v45, %v47
    %49 = vset.pattern.permute.xlu0 1
    %50 = vperm.xlu0 %49, %v40
    %v51 = vpop.permute.xlu0 %50
    %v53 = vperm.slane %v41, 1
    %v54 = vmul.f32 %v51, %v53
    %v55 = vadd.f32 %v48, %v54
    %56 = vset.pattern.permute.xlu0 2
    %57 = vperm.xlu0 %56, %v40
    %v58 = vpop.permute.xlu0 %57
    %v60 = vperm.slane %v41, 2
    %v61 = vmul.f32 %v58, %v60
    %v62 = vadd.f32 %v55, %v61
    %63 = vset.pattern.permute.xlu0 3
    %64 = vperm.xlu0 %63, %v40
    %v65 = vpop.permute.xlu0 %64
    %v67 = vperm.slane %v41, 3
    %v68 = vmul.f32 %v65, %v67
    %v69 = vadd.f32 %v62, %v68
    %v70 = vperm.slane %v41, 4
    %v71 = vadd.f32 %v69, %v70
    %vm72 = vcmask 254976
    %73 = vst.msk [vmem:[#allocation7] sm:$0x3] %vm72, %v71
    // Predicated region
    $region18: #{tpu_custom_call.1} parent=1 // pred_check
      _
    $region19: #{tpu_custom_call.1} parent=1 // pred_check_branch
      %75 = sbr.rel (0) target = $region21
    $region20: #{tpu_custom_call.1} parent=1 // pred_region
      %77 = vsyncadd [#allocation4], 0
      %s79 = sshll.u32 [#allocation7], 4
      %s80 = int_to_ptr.vmem [resolvable:$true] %s79
      %s81 = sshll.u32 %s2, 4
      %s82 = int_to_ptr.hbm [resolvable:$true] %s81
      %84 = dma.vmem_to_hbm [thread:$0]  %s80, 32, %s82, [#allocation4]
    $region21: #{tpu_custom_call.1} parent=1 // pred_fallthru
      _
    // Predicated region
    $region22: #{tpu_custom_call.1} parent=1 // pred_check
      _
    $region23: #{tpu_custom_call.1} parent=1 // pred_check_branch
      %86 = sbr.rel (0) target = $region25
    $region24: #{tpu_custom_call.1} parent=1 // pred_region
      %88 = dma.done [#allocation4], 32
    $region25: #{tpu_custom_call.1} parent=1 // pred_fallthru
      _
    %89 = vsyncpa [#allocation3], 1
    %90 = vsyncpa [#allocation6], 1
    %91 = vsyncpa [#allocation4], 1

</llo_original>
